<compile_context>
chip_gen: v6e
topology: v6e:2x2x1
jax: 0.10.0
libtpu: 0.0.40
codegen_flags: <defaults>
</compile_context>

<pallas_src>
import functools

import jax
import jax.numpy as jnp
from jax.experimental import pallas as pl
from jax.experimental.pallas import tpu as pltpu

INPUT_SIZE = 256 * 7 + 1        # 1793 (logical feature width)
H1, H2, H3 = 128, 32, 32
OUT = 3                         # logical output width
OUT_PAD = 8                     # padded output width (block last dim == full dim)


def _round_up(n, m):
    return (n + m - 1) // m * m


def nnue_kernel(x_ref, w1_ref, b1_ref, w2_ref, b2_ref, w3_ref, b3_ref,
                w4_ref, b4_ref, o_ref):
    # fc_1 + ReLU: x streams from HBM as f32; cast to bf16 in VMEM for the MXU
    # (f32 accumulate).  Mosaic masks the padded lanes of the K=1793 contraction.
    x = x_ref[...].astype(jnp.bfloat16)
    y = jnp.dot(x, w1_ref[...], preferred_element_type=jnp.float32) + b1_ref[...]
    y = jnp.maximum(y, 0.0)
    # fc_2 + ReLU (tiny; bf16 operands avoid multi-pass f32 MXU emulation)
    y = jnp.dot(y.astype(jnp.bfloat16), w2_ref[...],
                preferred_element_type=jnp.float32) + b2_ref[...]
    y = jnp.maximum(y, 0.0)
    # fc_3 + ReLU
    y = jnp.dot(y.astype(jnp.bfloat16), w3_ref[...],
                preferred_element_type=jnp.float32) + b3_ref[...]
    y = jnp.maximum(y, 0.0)
    # fc_4 (no activation); columns >= 3 of w4/b4 are zero-padded -> exact zeros.
    y = jnp.dot(y.astype(jnp.bfloat16), w4_ref[...],
                preferred_element_type=jnp.float32) + b4_ref[...]
    o_ref[...] = y.astype(o_ref.dtype)


@functools.partial(jax.jit, static_argnames=("tile_b",))
def nnue_forward(x, params, tile_b=1024):
    """x: [B, 1793] float32. params: w1..w4 ([in,out]) and b1..b4 ([1,out]) f32."""
    assert tile_b % 8 == 0, "tile_b must be a multiple of 8 (sublane alignment)"
    B, F = x.shape
    assert F == INPUT_SIZE

    # Clamp the batch tile for small batches; ragged last block is handled by
    # Pallas (masked output writeback), so no batch padding copy is made.
    tile_b_eff = min(tile_b, _round_up(B, 8))
    grid = (pl.cdiv(B, tile_b_eff),)

    # Weights are tiny (<1 MB total): one-time bf16 cast / 3->8 col pad is
    # negligible HBM traffic compared to the x stream.
    w1 = params["w1"].astype(jnp.bfloat16)
    w2 = params["w2"].astype(jnp.bfloat16)
    w3 = params["w3"].astype(jnp.bfloat16)
    w4 = jnp.pad(params["w4"], ((0, 0), (0, OUT_PAD - OUT))).astype(jnp.bfloat16)
    b1, b2, b3 = params["b1"], params["b2"], params["b3"]
    b4 = jnp.pad(params["b4"], ((0, 0), (0, OUT_PAD - OUT)))

    # Grid-invariant blocks: constant index_map -> DMA'd once, resident in VMEM.
    full = lambda r, c: pl.BlockSpec((r, c), lambda i: (0, 0))

    cost = pl.CostEstimate(
        flops=2 * B * (INPUT_SIZE * H1 + H1 * H2 + H2 * H3 + H3 * OUT_PAD),
        transcendentals=0,
        bytes_accessed=(B * INPUT_SIZE * 4                                   # f32 x stream
                        + (INPUT_SIZE * H1 + H1 * H2 + H2 * H3 + H3 * OUT_PAD) * 2
                        + (H1 + H2 + H3 + OUT_PAD) * 4
                        + B * OUT_PAD * 4),                                  # f32 output
    )

    out = pl.pallas_call(
        nnue_kernel,
        out_shape=jax.ShapeDtypeStruct((B, OUT_PAD), jnp.float32),
        grid_spec=pltpu.PrefetchScalarGridSpec(
            num_scalar_prefetch=0,
            grid=grid,
            in_specs=[
                pl.BlockSpec((tile_b_eff, INPUT_SIZE), lambda i: (i, 0)),  # x tile (f32)
                full(INPUT_SIZE, H1), full(1, H1),
                full(H1, H2), full(1, H2),
                full(H2, H3), full(1, H3),
                full(H3, OUT_PAD), full(1, OUT_PAD),
            ],
            out_specs=pl.BlockSpec((tile_b_eff, OUT_PAD), lambda i: (i, 0)),
        ),
        compiler_params=pltpu.CompilerParams(
            dimension_semantics=("parallel",),
            # tile_b=1024 -> ~22 MB (2x f32 x tiles + temporaries + weights):
            # above v5e's 16 MiB scoped default, below v7x's 64 MiB physical.
            vmem_limit_bytes=48 * 1024 * 1024,
        ),
        cost_estimate=cost,
    )(x, w1, b1, w2, b2, w3, b3, w4, b4)

    # Strip the 3->8 output lane padding (32 B/row read; negligible).
    return out[:, :OUT]


def init_params(key):
    """Deterministic init mimicking nn.Linear's U(-1/sqrt(fan_in), +1/sqrt(fan_in))."""
    dims = [(INPUT_SIZE, H1), (H1, H2), (H2, H3), (H3, OUT)]
    params = {}
    keys = jax.random.split(key, 2 * len(dims))
    for idx, (fan_in, fan_out) in enumerate(dims):
        bound = 1.0 / jnp.sqrt(float(fan_in))
        w = jax.random.uniform(keys[2 * idx], (fan_in, fan_out),
                               minval=-bound, maxval=bound, dtype=jnp.float32)
        b = jax.random.uniform(keys[2 * idx + 1], (1, fan_out),
                               minval=-bound, maxval=bound, dtype=jnp.float32)
        params[f"w{idx + 1}"] = w
        params[f"b{idx + 1}"] = b
    return params


def nnue_reference(x, params):
    """Pure-JAX f32 reference (matches the PyTorch module)."""
    y = x
    for i in range(1, 5):
        y = y @ params[f"w{i}"] + params[f"b{i}"]
        if i < 4:
            y = jnp.maximum(y, 0.0)
    return y


if __name__ == "__main__":
    key = jax.random.PRNGKey(0)
    pkey, xkey = jax.random.split(key)
    params = init_params(pkey)

    batch = 8  # small smoke-test batch; wrapper clamps the tile accordingly
    x = jax.random.normal(xkey, (batch, INPUT_SIZE), dtype=jnp.float32)

    out = jax.block_until_ready(nnue_forward(x, params))
    ref = nnue_reference(x, params)

    assert out.shape == (batch, OUT)
    # MXU dots run in bf16 (f32 accumulate) -> loosened tolerance vs. the
    # all-f32 reference.
    assert jnp.allclose(out, ref, atol=5e-2, rtol=5e-2), "mismatch vs reference"

    print("KERNEL_OK")
</pallas_src>

<mosaic_0001>
module attributes {stable_mosaic.version = 11 : i64} {
  func.func @nnue_kernel(%arg0: i32, %arg1: memref<8x1793xf32, #tpu.memory_space<vmem>>, %arg2: memref<1793x128xbf16, #tpu.memory_space<vmem>>, %arg3: memref<1x128xf32, #tpu.memory_space<vmem>>, %arg4: memref<128x32xbf16, #tpu.memory_space<vmem>>, %arg5: memref<1x32xf32, #tpu.memory_space<vmem>>, %arg6: memref<32x32xbf16, #tpu.memory_space<vmem>>, %arg7: memref<1x32xf32, #tpu.memory_space<vmem>>, %arg8: memref<32x8xbf16, #tpu.memory_space<vmem>>, %arg9: memref<1x8xf32, #tpu.memory_space<vmem>>, %arg10: memref<8x8xf32, #tpu.memory_space<vmem>>) attributes {dimension_semantics = [#tpu.dimension_semantics<parallel>], iteration_bounds = array<i64: 1>, scalar_prefetch = 0 : i64, scratch_operands = 0 : i64, tpu.core_type = #tpu.core_type<tc>, window_params = [{transform_indices = @transform_0, window_bounds = array<i64: 8, 1793>}, {pipeline_mode = #tpu.pipeline_mode<synchronous>, transform_indices = @transform_1, window_bounds = array<i64: 1793, 128>}, {pipeline_mode = #tpu.pipeline_mode<synchronous>, transform_indices = @transform_2, window_bounds = array<i64: 1, 128>}, {pipeline_mode = #tpu.pipeline_mode<synchronous>, transform_indices = @transform_3, window_bounds = array<i64: 128, 32>}, {pipeline_mode = #tpu.pipeline_mode<synchronous>, transform_indices = @transform_4, window_bounds = array<i64: 1, 32>}, {pipeline_mode = #tpu.pipeline_mode<synchronous>, transform_indices = @transform_5, window_bounds = array<i64: 32, 32>}, {pipeline_mode = #tpu.pipeline_mode<synchronous>, transform_indices = @transform_6, window_bounds = array<i64: 1, 32>}, {pipeline_mode = #tpu.pipeline_mode<synchronous>, transform_indices = @transform_7, window_bounds = array<i64: 32, 8>}, {pipeline_mode = #tpu.pipeline_mode<synchronous>, transform_indices = @transform_8, window_bounds = array<i64: 1, 8>}, {transform_indices = @transform_9, window_bounds = array<i64: 8, 8>}]} {
    %c0 = arith.constant 0 : index
    %c0_0 = arith.constant 0 : index
    %0 = vector.load %arg1[%c0, %c0_0] : memref<8x1793xf32, #tpu.memory_space<vmem>>, vector<8x1793xf32>
    %1 = arith.truncf %0 : vector<8x1793xf32> to vector<8x1793xbf16>
    %c0_1 = arith.constant 0 : index
    %c0_2 = arith.constant 0 : index
    %2 = vector.load %arg2[%c0_1, %c0_2] : memref<1793x128xbf16, #tpu.memory_space<vmem>>, vector<1793x128xbf16>
    %cst = arith.constant dense<0.000000e+00> : vector<8x128xf32>
    %3 = tpu.matmul %1, %2, %cst {dimension_numbers = #tpu.dot_dimension_numbers<[1], [0], [0], [1], [0, 0, 1, 1], [], []>} : vector<8x1793xbf16>, vector<1793x128xbf16>, vector<8x128xf32> -> vector<8x128xf32>
    %c0_3 = arith.constant 0 : index
    %c0_4 = arith.constant 0 : index
    %4 = vector.load %arg3[%c0_3, %c0_4] : memref<1x128xf32, #tpu.memory_space<vmem>>, vector<1x128xf32>
    %5 = vector.broadcast %4 : vector<1x128xf32> to vector<8x128xf32>
    %6 = arith.addf %3, %5 : vector<8x128xf32>
    %cst_5 = arith.constant 0.000000e+00 : f32
    %7 = vector.broadcast %cst_5 : f32 to vector<8x128xf32>
    %8 = arith.maximumf %6, %7 : vector<8x128xf32>
    %9 = arith.truncf %8 : vector<8x128xf32> to vector<8x128xbf16>
    %c0_6 = arith.constant 0 : index
    %c0_7 = arith.constant 0 : index
    %10 = vector.load %arg4[%c0_6, %c0_7] : memref<128x32xbf16, #tpu.memory_space<vmem>>, vector<128x32xbf16>
    %cst_8 = arith.constant dense<0.000000e+00> : vector<8x32xf32>
    %11 = tpu.matmul %9, %10, %cst_8 {dimension_numbers = #tpu.dot_dimension_numbers<[1], [0], [0], [1], [0, 0, 1, 1], [], []>} : vector<8x128xbf16>, vector<128x32xbf16>, vector<8x32xf32> -> vector<8x32xf32>
    %c0_9 = arith.constant 0 : index
    %c0_10 = arith.constant 0 : index
    %12 = vector.load %arg5[%c0_9, %c0_10] : memref<1x32xf32, #tpu.memory_space<vmem>>, vector<1x32xf32>
    %13 = vector.broadcast %12 : vector<1x32xf32> to vector<8x32xf32>
    %14 = arith.addf %11, %13 : vector<8x32xf32>
    %cst_11 = arith.constant 0.000000e+00 : f32
    %15 = vector.broadcast %cst_11 : f32 to vector<8x32xf32>
    %16 = arith.maximumf %14, %15 : vector<8x32xf32>
    %17 = arith.truncf %16 : vector<8x32xf32> to vector<8x32xbf16>
    %c0_12 = arith.constant 0 : index
    %c0_13 = arith.constant 0 : index
    %18 = vector.load %arg6[%c0_12, %c0_13] : memref<32x32xbf16, #tpu.memory_space<vmem>>, vector<32x32xbf16>
    %cst_14 = arith.constant dense<0.000000e+00> : vector<8x32xf32>
    %19 = tpu.matmul %17, %18, %cst_14 {dimension_numbers = #tpu.dot_dimension_numbers<[1], [0], [0], [1], [0, 0, 1, 1], [], []>} : vector<8x32xbf16>, vector<32x32xbf16>, vector<8x32xf32> -> vector<8x32xf32>
    %c0_15 = arith.constant 0 : index
    %c0_16 = arith.constant 0 : index
    %20 = vector.load %arg7[%c0_15, %c0_16] : memref<1x32xf32, #tpu.memory_space<vmem>>, vector<1x32xf32>
    %21 = vector.broadcast %20 : vector<1x32xf32> to vector<8x32xf32>
    %22 = arith.addf %19, %21 : vector<8x32xf32>
    %cst_17 = arith.constant 0.000000e+00 : f32
    %23 = vector.broadcast %cst_17 : f32 to vector<8x32xf32>
    %24 = arith.maximumf %22, %23 : vector<8x32xf32>
    %25 = arith.truncf %24 : vector<8x32xf32> to vector<8x32xbf16>
    %c0_18 = arith.constant 0 : index
    %c0_19 = arith.constant 0 : index
    %26 = vector.load %arg8[%c0_18, %c0_19] : memref<32x8xbf16, #tpu.memory_space<vmem>>, vector<32x8xbf16>
    %cst_20 = arith.constant dense<0.000000e+00> : vector<8x8xf32>
    %27 = tpu.matmul %25, %26, %cst_20 {dimension_numbers = #tpu.dot_dimension_numbers<[1], [0], [0], [1], [0, 0, 1, 1], [], []>} : vector<8x32xbf16>, vector<32x8xbf16>, vector<8x8xf32> -> vector<8x8xf32>
    %c0_21 = arith.constant 0 : index
    %c0_22 = arith.constant 0 : index
    %28 = vector.load %arg9[%c0_21, %c0_22] : memref<1x8xf32, #tpu.memory_space<vmem>>, vector<1x8xf32>
    %29 = vector.broadcast %28 : vector<1x8xf32> to vector<8x8xf32>
    %30 = arith.addf %27, %29 : vector<8x8xf32>
    %c0_23 = arith.constant 0 : index
    %c0_24 = arith.constant 0 : index
    %31 = vector.load %arg10[%c0_23, %c0_24] : memref<8x8xf32, #tpu.memory_space<vmem>>, vector<8x8xf32>
    tpu.vector_store %arg10[%c0_23, %c0_24], %30 {strides = array<i32>} : memref<8x8xf32, #tpu.memory_space<vmem>>, vector<8x8xf32>,
    return
  }
  func.func @transform_0(%arg0: i32) -> (i32, i32) {
    %c0_i32 = arith.constant 0 : i32
    %c0_i32_0 = arith.constant 0 : i32
    return %arg0, %c0_i32 : i32, i32
  }
  func.func @transform_1(%arg0: i32) -> (i32, i32) {
    %c0_i32 = arith.constant 0 : i32
    %c0_i32_0 = arith.constant 0 : i32
    %c0_i32_1 = arith.constant 0 : i32
    return %c0_i32, %c0_i32_0 : i32, i32
  }
  func.func @transform_2(%arg0: i32) -> (i32, i32) {
    %c0_i32 = arith.constant 0 : i32
    %c0_i32_0 = arith.constant 0 : i32
    %c0_i32_1 = arith.constant 0 : i32
    return %c0_i32, %c0_i32_0 : i32, i32
  }
  func.func @transform_3(%arg0: i32) -> (i32, i32) {
    %c0_i32 = arith.constant 0 : i32
    %c0_i32_0 = arith.constant 0 : i32
    %c0_i32_1 = arith.constant 0 : i32
    return %c0_i32, %c0_i32_0 : i32, i32
  }
  func.func @transform_4(%arg0: i32) -> (i32, i32) {
    %c0_i32 = arith.constant 0 : i32
    %c0_i32_0 = arith.constant 0 : i32
    %c0_i32_1 = arith.constant 0 : i32
    return %c0_i32, %c0_i32_0 : i32, i32
  }
  func.func @transform_5(%arg0: i32) -> (i32, i32) {
    %c0_i32 = arith.constant 0 : i32
    %c0_i32_0 = arith.constant 0 : i32
    %c0_i32_1 = arith.constant 0 : i32
    return %c0_i32, %c0_i32_0 : i32, i32
  }
  func.func @transform_6(%arg0: i32) -> (i32, i32) {
    %c0_i32 = arith.constant 0 : i32
    %c0_i32_0 = arith.constant 0 : i32
    %c0_i32_1 = arith.constant 0 : i32
    return %c0_i32, %c0_i32_0 : i32, i32
  }
  func.func @transform_7(%arg0: i32) -> (i32, i32) {
    %c0_i32 = arith.constant 0 : i32
    %c0_i32_0 = arith.constant 0 : i32
    %c0_i32_1 = arith.constant 0 : i32
    return %c0_i32, %c0_i32_0 : i32, i32
  }
  func.func @transform_8(%arg0: i32) -> (i32, i32) {
    %c0_i32 = arith.constant 0 : i32
    %c0_i32_0 = arith.constant 0 : i32
    %c0_i32_1 = arith.constant 0 : i32
    return %c0_i32, %c0_i32_0 : i32, i32
  }
  func.func @transform_9(%arg0: i32) -> (i32, i32) {
    %c0_i32 = arith.constant 0 : i32
    %c0_i32_0 = arith.constant 0 : i32
    return %arg0, %c0_i32 : i32, i32
  }
}

</mosaic_0001>

<llo_original>
// kernel: nnue_forward.1
$region0: #{nnue_forward.1}
  #allocation0 [shape = 'u32[]', space=smem, size = 0x4, offset = 0x4, fixed_abs, tag = 'smem constant byte address 0x4 - core index']
  #allocation1 [shape = 'u32[144,128]{1,0:T(1,128)}', space=vmem, size = 0x12000, scoped, tag = 'internal scratch']
  %s0 = inlined_call_operand.vmem [shape: f32[8,1793], index: 0, kind: input, shape index: {}]
  %s1 = inlined_call_operand.vmem [shape: bf16[1793,128], index: 1, kind: input, shape index: {}]
  %s2 = inlined_call_operand.vmem [shape: f32[1,128], index: 2, kind: input, shape index: {}]
  %s3 = inlined_call_operand.vmem [shape: bf16[128,32], index: 3, kind: input, shape index: {}]
  %s4 = inlined_call_operand.vmem [shape: f32[1,32], index: 4, kind: input, shape index: {}]
  %s5 = inlined_call_operand.vmem [shape: bf16[32,32], index: 5, kind: input, shape index: {}]
  %s6 = inlined_call_operand.vmem [shape: f32[1,32], index: 6, kind: input, shape index: {}]
  %s7 = inlined_call_operand.vmem [shape: bf16[32,8], index: 7, kind: input, shape index: {}]
  %s8 = inlined_call_operand.vmem [shape: f32[1,8], index: 8, kind: input, shape index: {}]
  %s9 = inlined_call_operand.vmem [shape: f32[8,8], index: 9, kind: output, shape index: {}]
  %s10 = sld [smem:[#allocation0]]
  $region46: #{nnue_forward.1} parent=0
    _
  %s12 = ssub.s32 1, %s10
  %s13 = scalar_select 0, %s12, %s10
  // Predicated region
  $region2: #{nnue_forward.1} parent=0 // pred_check
    _
  $region3: #{nnue_forward.1} parent=0 // pred_check_branch
    %15 = sbr.rel (0) target = $region5
  $region4: #{nnue_forward.1} parent=0 // pred_region
    _
  $region5: #{nnue_forward.1} parent=0 // pred_fallthru
    _
  // Predicated region
  $region6: #{nnue_forward.1} parent=0 // pred_check
    _
  $region7: #{nnue_forward.1} parent=0 // pred_check_branch
    %17 = sbr.rel (0) target = $region9
  $region8: #{nnue_forward.1} parent=0 // pred_region
    _
  $region9: #{nnue_forward.1} parent=0 // pred_fallthru
    _
  // Predicated region
  $region10: #{nnue_forward.1} parent=0 // pred_check
    _
  $region11: #{nnue_forward.1} parent=0 // pred_check_branch
    %19 = sbr.rel (0) target = $region13
  $region12: #{nnue_forward.1} parent=0 // pred_region
    _
  $region13: #{nnue_forward.1} parent=0 // pred_fallthru
    _
  // Predicated region
  $region14: #{nnue_forward.1} parent=0 // pred_check
    _
  $region15: #{nnue_forward.1} parent=0 // pred_check_branch
    %21 = sbr.rel (0) target = $region17
  $region16: #{nnue_forward.1} parent=0 // pred_region
    _
  $region17: #{nnue_forward.1} parent=0 // pred_fallthru
    _
  // Predicated region
  $region18: #{nnue_forward.1} parent=0 // pred_check
    _
  $region19: #{nnue_forward.1} parent=0 // pred_check_branch
    %23 = sbr.rel (0) target = $region21
  $region20: #{nnue_forward.1} parent=0 // pred_region
    _
  $region21: #{nnue_forward.1} parent=0 // pred_fallthru
    _
  // Predicated region
  $region22: #{nnue_forward.1} parent=0 // pred_check
    _
  $region23: #{nnue_forward.1} parent=0 // pred_check_branch
    %25 = sbr.rel (0) target = $region25
  $region24: #{nnue_forward.1} parent=0 // pred_region
    _
  $region25: #{nnue_forward.1} parent=0 // pred_fallthru
    _
  // Predicated region
  $region26: #{nnue_forward.1} parent=0 // pred_check
    _
  $region27: #{nnue_forward.1} parent=0 // pred_check_branch
    %27 = sbr.rel (0) target = $region29
  $region28: #{nnue_forward.1} parent=0 // pred_region
    _
  $region29: #{nnue_forward.1} parent=0 // pred_fallthru
    _
  // Predicated region
  $region30: #{nnue_forward.1} parent=0 // pred_check
    _
  $region31: #{nnue_forward.1} parent=0 // pred_check_branch
    %29 = sbr.rel (0) target = $region33
  $region32: #{nnue_forward.1} parent=0 // pred_region
    _
  $region33: #{nnue_forward.1} parent=0 // pred_fallthru
    _
  // Predicated region
  $region34: #{nnue_forward.1} parent=0 // pred_check
    _
  $region35: #{nnue_forward.1} parent=0 // pred_check_branch
    %31 = sbr.rel (0) target = $region37
  $region36: #{nnue_forward.1} parent=0 // pred_region
    _
  $region37: #{nnue_forward.1} parent=0 // pred_fallthru
    _
  %v33 = vld [vmem:[%s0] sm:$0xff]
  %v34 = vld [vmem:[%s0 + $0x8] sm:$0xff]
  %v35 = vld [vmem:[%s0 + $0x10] sm:$0xff]
  %v36 = vld [vmem:[%s0 + $0x18] sm:$0xff]
  %v37 = vld [vmem:[%s0 + $0x20] sm:$0xff]
  %v38 = vld [vmem:[%s0 + $0x28] sm:$0xff]
  %v39 = vld [vmem:[%s0 + $0x30] sm:$0xff]
  %v40 = vld [vmem:[%s0 + $0x38] sm:$0xff]
  %v41 = vld [vmem:[%s0 + $0x40] sm:$0xff]
  %v42 = vld [vmem:[%s0 + $0x48] sm:$0xff]
  %v43 = vld [vmem:[%s0 + $0x50] sm:$0xff]
  %v44 = vld [vmem:[%s0 + $0x58] sm:$0xff]
  %v45 = vld [vmem:[%s0 + $0x60] sm:$0xff]
  %v46 = vld [vmem:[%s0 + $0x68] sm:$0xff]
  %v47 = vld [vmem:[%s0 + $0x70] sm:$0xff]
  %v48 = vpack.c.bf16 %v33, %v33
  %v49 = vpack.c.bf16 %v34, %v34
  %v50 = vpack.c.bf16 %v35, %v35
  %v51 = vpack.c.bf16 %v36, %v36
  %v52 = vpack.c.bf16 %v37, %v37
  %v53 = vpack.c.bf16 %v38, %v38
  %v54 = vpack.c.bf16 %v39, %v39
  %v55 = vpack.c.bf16 %v40, %v40
  %v56 = vpack.c.bf16 %v41, %v41
  %v57 = vpack.c.bf16 %v42, %v42
  %v58 = vpack.c.bf16 %v43, %v43
  %v59 = vpack.c.bf16 %v44, %v44
  %v60 = vpack.c.bf16 %v45, %v45
  %v61 = vpack.c.bf16 %v46, %v46
  %v62 = vpack.c.bf16 %v47, %v47
  %v63 = vld [vmem:[%s1] sm:$0xf]
  %v64 = vld [vmem:[%s1 + $0x4] sm:$0xf]
  %v65 = vld [vmem:[%s1 + $0x8] sm:$0xf]
  %v66 = vld [vmem:[%s1 + $0xc] sm:$0xf]
  %v67 = vld [vmem:[%s1 + $0x10] sm:$0xf]
  %v68 = vld [vmem:[%s1 + $0x14] sm:$0xf]
  %v69 = vld [vmem:[%s1 + $0x18] sm:$0xf]
  %v70 = vld [vmem:[%s1 + $0x1c] sm:$0xf]
  %v71 = vld [vmem:[%s1 + $0x20] sm:$0xf]
  %v72 = vld [vmem:[%s1 + $0x24] sm:$0xf]
  %v73 = vld [vmem:[%s1 + $0x28] sm:$0xf]
  %v74 = vld [vmem:[%s1 + $0x2c] sm:$0xf]
  %v75 = vld [vmem:[%s1 + $0x30] sm:$0xf]
  %v76 = vld [vmem:[%s1 + $0x34] sm:$0xf]
  %v77 = vld [vmem:[%s1 + $0x38] sm:$0xf]
  %v78 = vld [vmem:[%s1 + $0x3c] sm:$0xf]
  %v79 = vld [vmem:[%s1 + $0x40] sm:$0xf]
  %v80 = vld [vmem:[%s1 + $0x44] sm:$0xf]
  %v81 = vld [vmem:[%s1 + $0x48] sm:$0xf]
  %v82 = vld [vmem:[%s1 + $0x4c] sm:$0xf]
  %v83 = vld [vmem:[%s1 + $0x50] sm:$0xf]
  %v84 = vld [vmem:[%s1 + $0x54] sm:$0xf]
  %v85 = vld [vmem:[%s1 + $0x58] sm:$0xf]
  %v86 = vld [vmem:[%s1 + $0x5c] sm:$0xf]
  %v87 = vld [vmem:[%s1 + $0x60] sm:$0xf]
  %v88 = vld [vmem:[%s1 + $0x64] sm:$0xf]
  %v89 = vld [vmem:[%s1 + $0x68] sm:$0xf]
  %v90 = vld [vmem:[%s1 + $0x6c] sm:$0xf]
  %v91 = vld [vmem:[%s1 + $0x70] sm:$0xf]
  %v92 = vld [vmem:[%s1 + $0x74] sm:$0xf]
  %v93 = vld [vmem:[%s1 + $0x78] sm:$0xf]
  %v94 = vld [vmem:[%s1 + $0x7c] sm:$0xf]
  %v95 = vld [vmem:[%s1 + $0x80] sm:$0xf]
  %v96 = vld [vmem:[%s1 + $0x84] sm:$0xf]
  %v97 = vld [vmem:[%s1 + $0x88] sm:$0xf]
  %v98 = vld [vmem:[%s1 + $0x8c] sm:$0xf]
  %v99 = vld [vmem:[%s1 + $0x90] sm:$0xf]
  %v100 = vld [vmem:[%s1 + $0x94] sm:$0xf]
  %v101 = vld [vmem:[%s1 + $0x98] sm:$0xf]
  %v102 = vld [vmem:[%s1 + $0x9c] sm:$0xf]
  %v103 = vld [vmem:[%s1 + $0xa0] sm:$0xf]
  %v104 = vld [vmem:[%s1 + $0xa4] sm:$0xf]
  %v105 = vld [vmem:[%s1 + $0xa8] sm:$0xf]
  %v106 = vld [vmem:[%s1 + $0xac] sm:$0xf]
  %v107 = vld [vmem:[%s1 + $0xb0] sm:$0xf]
  %v108 = vld [vmem:[%s1 + $0xb4] sm:$0xf]
  %v109 = vld [vmem:[%s1 + $0xb8] sm:$0xf]
  %v110 = vld [vmem:[%s1 + $0xbc] sm:$0xf]
  %v111 = vld [vmem:[%s1 + $0xc0] sm:$0xf]
  %v112 = vld [vmem:[%s1 + $0xc4] sm:$0xf]
  %v113 = vld [vmem:[%s1 + $0xc8] sm:$0xf]
  %v114 = vld [vmem:[%s1 + $0xcc] sm:$0xf]
  %v115 = vld [vmem:[%s1 + $0xd0] sm:$0xf]
  %v116 = vld [vmem:[%s1 + $0xd4] sm:$0xf]
  %v117 = vld [vmem:[%s1 + $0xd8] sm:$0xf]
  %v118 = vld [vmem:[%s1 + $0xdc] sm:$0xf]
  %v119 = vld [vmem:[%s1 + $0xe0] sm:$0xf]
  %v120 = vld [vmem:[%s1 + $0xe4] sm:$0xf]
  %v121 = vld [vmem:[%s1 + $0xe8] sm:$0xf]
  %v122 = vld [vmem:[%s1 + $0xec] sm:$0xf]
  %v123 = vld [vmem:[%s1 + $0xf0] sm:$0xf]
  %v124 = vld [vmem:[%s1 + $0xf4] sm:$0xf]
  %v125 = vld [vmem:[%s1 + $0xf8] sm:$0xf]
  %v126 = vld [vmem:[%s1 + $0xfc] sm:$0xf]
  %v127 = vld [vmem:[%s1 + $0x100] sm:$0xf]
  %v128 = vld [vmem:[%s1 + $0x104] sm:$0xf]
  %v129 = vld [vmem:[%s1 + $0x108] sm:$0xf]
  %v130 = vld [vmem:[%s1 + $0x10c] sm:$0xf]
  %v131 = vld [vmem:[%s1 + $0x110] sm:$0xf]
  %v132 = vld [vmem:[%s1 + $0x114] sm:$0xf]
  %v133 = vld [vmem:[%s1 + $0x118] sm:$0xf]
  %v134 = vld [vmem:[%s1 + $0x11c] sm:$0xf]
  %v135 = vld [vmem:[%s1 + $0x120] sm:$0xf]
  %v136 = vld [vmem:[%s1 + $0x124] sm:$0xf]
  %v137 = vld [vmem:[%s1 + $0x128] sm:$0xf]
  %v138 = vld [vmem:[%s1 + $0x12c] sm:$0xf]
  %v139 = vld [vmem:[%s1 + $0x130] sm:$0xf]
  %v140 = vld [vmem:[%s1 + $0x134] sm:$0xf]
  %v141 = vld [vmem:[%s1 + $0x138] sm:$0xf]
  %v142 = vld [vmem:[%s1 + $0x13c] sm:$0xf]
  %v143 = vld [vmem:[%s1 + $0x140] sm:$0xf]
  %v144 = vld [vmem:[%s1 + $0x144] sm:$0xf]
  %v145 = vld [vmem:[%s1 + $0x148] sm:$0xf]
  %v146 = vld [vmem:[%s1 + $0x14c] sm:$0xf]
  %v147 = vld [vmem:[%s1 + $0x150] sm:$0xf]
  %v148 = vld [vmem:[%s1 + $0x154] sm:$0xf]
  %v149 = vld [vmem:[%s1 + $0x158] sm:$0xf]
  %v150 = vld [vmem:[%s1 + $0x15c] sm:$0xf]
  %v151 = vld [vmem:[%s1 + $0x160] sm:$0xf]
  %v152 = vld [vmem:[%s1 + $0x164] sm:$0xf]
  %v153 = vld [vmem:[%s1 + $0x168] sm:$0xf]
  %v154 = vld [vmem:[%s1 + $0x16c] sm:$0xf]
  %v155 = vld [vmem:[%s1 + $0x170] sm:$0xf]
  %v156 = vld [vmem:[%s1 + $0x174] sm:$0xf]
  %v157 = vld [vmem:[%s1 + $0x178] sm:$0xf]
  %v158 = vld [vmem:[%s1 + $0x17c] sm:$0xf]
  %v159 = vld [vmem:[%s1 + $0x180] sm:$0xf]
  %v160 = vld [vmem:[%s1 + $0x184] sm:$0xf]
  %v161 = vld [vmem:[%s1 + $0x188] sm:$0xf]
  %v162 = vld [vmem:[%s1 + $0x18c] sm:$0xf]
  %v163 = vld [vmem:[%s1 + $0x190] sm:$0xf]
  %v164 = vld [vmem:[%s1 + $0x194] sm:$0xf]
  %v165 = vld [vmem:[%s1 + $0x198] sm:$0xf]
  %v166 = vld [vmem:[%s1 + $0x19c] sm:$0xf]
  %v167 = vld [vmem:[%s1 + $0x1a0] sm:$0xf]
  %v168 = vld [vmem:[%s1 + $0x1a4] sm:$0xf]
  %v169 = vld [vmem:[%s1 + $0x1a8] sm:$0xf]
  %v170 = vld [vmem:[%s1 + $0x1ac] sm:$0xf]
  %v171 = vld [vmem:[%s1 + $0x1b0] sm:$0xf]
  %v172 = vld [vmem:[%s1 + $0x1b4] sm:$0xf]
  %v173 = vld [vmem:[%s1 + $0x1b8] sm:$0xf]
  %v174 = vld [vmem:[%s1 + $0x1bc] sm:$0xf]
  %v175 = vld [vmem:[%s1 + $0x1c0] sm:$0xf]
  %v176 = vld [vmem:[%s1 + $0x1c4] sm:$0xf]
  %v177 = vld [vmem:[%s1 + $0x1c8] sm:$0xf]
  %v178 = vld [vmem:[%s1 + $0x1cc] sm:$0xf]
  %v179 = vld [vmem:[%s1 + $0x1d0] sm:$0xf]
  %v180 = vld [vmem:[%s1 + $0x1d4] sm:$0xf]
  %v181 = vld [vmem:[%s1 + $0x1d8] sm:$0xf]
  %v182 = vld [vmem:[%s1 + $0x1dc] sm:$0xf]
  %v183 = vld [vmem:[%s1 + $0x1e0] sm:$0xf]
  %v184 = vld [vmem:[%s1 + $0x1e4] sm:$0xf]
  %v185 = vld [vmem:[%s1 + $0x1e8] sm:$0xf]
  %v186 = vld [vmem:[%s1 + $0x1ec] sm:$0xf]
  %v187 = vld [vmem:[%s1 + $0x1f0] sm:$0xf]
  %v188 = vld [vmem:[%s1 + $0x1f4] sm:$0xf]
  %v189 = vld [vmem:[%s1 + $0x1f8] sm:$0xf]
  %v190 = vld [vmem:[%s1 + $0x1fc] sm:$0xf]
  %v191 = vld [vmem:[%s1 + $0x200] sm:$0xf]
  %v192 = vld [vmem:[%s1 + $0x204] sm:$0xf]
  %v193 = vld [vmem:[%s1 + $0x208] sm:$0xf]
  %v194 = vld [vmem:[%s1 + $0x20c] sm:$0xf]
  %v195 = vld [vmem:[%s1 + $0x210] sm:$0xf]
  %v196 = vld [vmem:[%s1 + $0x214] sm:$0xf]
  %v197 = vld [vmem:[%s1 + $0x218] sm:$0xf]
  %v198 = vld [vmem:[%s1 + $0x21c] sm:$0xf]
  %v199 = vld [vmem:[%s1 + $0x220] sm:$0xf]
  %v200 = vld [vmem:[%s1 + $0x224] sm:$0xf]
  %v201 = vld [vmem:[%s1 + $0x228] sm:$0xf]
  %v202 = vld [vmem:[%s1 + $0x22c] sm:$0xf]
  %v203 = vld [vmem:[%s1 + $0x230] sm:$0xf]
  %v204 = vld [vmem:[%s1 + $0x234] sm:$0xf]
  %v205 = vld [vmem:[%s1 + $0x238] sm:$0xf]
  %v206 = vld [vmem:[%s1 + $0x23c] sm:$0xf]
  %v207 = vld [vmem:[%s1 + $0x240] sm:$0xf]
  %v208 = vld [vmem:[%s1 + $0x244] sm:$0xf]
  %v209 = vld [vmem:[%s1 + $0x248] sm:$0xf]
  %v210 = vld [vmem:[%s1 + $0x24c] sm:$0xf]
  %v211 = vld [vmem:[%s1 + $0x250] sm:$0xf]
  %v212 = vld [vmem:[%s1 + $0x254] sm:$0xf]
  %v213 = vld [vmem:[%s1 + $0x258] sm:$0xf]
  %v214 = vld [vmem:[%s1 + $0x25c] sm:$0xf]
  %v215 = vld [vmem:[%s1 + $0x260] sm:$0xf]
  %v216 = vld [vmem:[%s1 + $0x264] sm:$0xf]
  %v217 = vld [vmem:[%s1 + $0x268] sm:$0xf]
  %v218 = vld [vmem:[%s1 + $0x26c] sm:$0xf]
  %v219 = vld [vmem:[%s1 + $0x270] sm:$0xf]
  %v220 = vld [vmem:[%s1 + $0x274] sm:$0xf]
  %v221 = vld [vmem:[%s1 + $0x278] sm:$0xf]
  %v222 = vld [vmem:[%s1 + $0x27c] sm:$0xf]
  %v223 = vld [vmem:[%s1 + $0x280] sm:$0xf]
  %v224 = vld [vmem:[%s1 + $0x284] sm:$0xf]
  %v225 = vld [vmem:[%s1 + $0x288] sm:$0xf]
  %v226 = vld [vmem:[%s1 + $0x28c] sm:$0xf]
  %v227 = vld [vmem:[%s1 + $0x290] sm:$0xf]
  %v228 = vld [vmem:[%s1 + $0x294] sm:$0xf]
  %v229 = vld [vmem:[%s1 + $0x298] sm:$0xf]
  %v230 = vld [vmem:[%s1 + $0x29c] sm:$0xf]
  %v231 = vld [vmem:[%s1 + $0x2a0] sm:$0xf]
  %v232 = vld [vmem:[%s1 + $0x2a4] sm:$0xf]
  %v233 = vld [vmem:[%s1 + $0x2a8] sm:$0xf]
  %v234 = vld [vmem:[%s1 + $0x2ac] sm:$0xf]
  %v235 = vld [vmem:[%s1 + $0x2b0] sm:$0xf]
  %v236 = vld [vmem:[%s1 + $0x2b4] sm:$0xf]
  %v237 = vld [vmem:[%s1 + $0x2b8] sm:$0xf]
  %v238 = vld [vmem:[%s1 + $0x2bc] sm:$0xf]
  %v239 = vld [vmem:[%s1 + $0x2c0] sm:$0xf]
  %v240 = vld [vmem:[%s1 + $0x2c4] sm:$0xf]
  %v241 = vld [vmem:[%s1 + $0x2c8] sm:$0xf]
  %v242 = vld [vmem:[%s1 + $0x2cc] sm:$0xf]
  %v243 = vld [vmem:[%s1 + $0x2d0] sm:$0xf]
  %v244 = vld [vmem:[%s1 + $0x2d4] sm:$0xf]
  %v245 = vld [vmem:[%s1 + $0x2d8] sm:$0xf]
  %v246 = vld [vmem:[%s1 + $0x2dc] sm:$0xf]
  %v247 = vld [vmem:[%s1 + $0x2e0] sm:$0xf]
  %v248 = vld [vmem:[%s1 + $0x2e4] sm:$0xf]
  %v249 = vld [vmem:[%s1 + $0x2e8] sm:$0xf]
  %v250 = vld [vmem:[%s1 + $0x2ec] sm:$0xf]
  %v251 = vld [vmem:[%s1 + $0x2f0] sm:$0xf]
  %v252 = vld [vmem:[%s1 + $0x2f4] sm:$0xf]
  %v253 = vld [vmem:[%s1 + $0x2f8] sm:$0xf]
  %v254 = vld [vmem:[%s1 + $0x2fc] sm:$0xf]
  %v255 = vld [vmem:[%s1 + $0x300] sm:$0xf]
  %v256 = vld [vmem:[%s1 + $0x304] sm:$0xf]
  %v257 = vld [vmem:[%s1 + $0x308] sm:$0xf]
  %v258 = vld [vmem:[%s1 + $0x30c] sm:$0xf]
  %v259 = vld [vmem:[%s1 + $0x310] sm:$0xf]
  %v260 = vld [vmem:[%s1 + $0x314] sm:$0xf]
  %v261 = vld [vmem:[%s1 + $0x318] sm:$0xf]
  %v262 = vld [vmem:[%s1 + $0x31c] sm:$0xf]
  %v263 = vld [vmem:[%s1 + $0x320] sm:$0xf]
  %v264 = vld [vmem:[%s1 + $0x324] sm:$0xf]
  %v265 = vld [vmem:[%s1 + $0x328] sm:$0xf]
  %v266 = vld [vmem:[%s1 + $0x32c] sm:$0xf]
  %v267 = vld [vmem:[%s1 + $0x330] sm:$0xf]
  %v268 = vld [vmem:[%s1 + $0x334] sm:$0xf]
  %v269 = vld [vmem:[%s1 + $0x338] sm:$0xf]
  %v270 = vld [vmem:[%s1 + $0x33c] sm:$0xf]
  %v271 = vld [vmem:[%s1 + $0x340] sm:$0xf]
  %v272 = vld [vmem:[%s1 + $0x344] sm:$0xf]
  %v273 = vld [vmem:[%s1 + $0x348] sm:$0xf]
  %v274 = vld [vmem:[%s1 + $0x34c] sm:$0xf]
  %v275 = vld [vmem:[%s1 + $0x350] sm:$0xf]
  %v276 = vld [vmem:[%s1 + $0x354] sm:$0xf]
  %v277 = vld [vmem:[%s1 + $0x358] sm:$0xf]
  %v278 = vld [vmem:[%s1 + $0x35c] sm:$0xf]
  %v279 = vld [vmem:[%s1 + $0x360] sm:$0xf]
  %v280 = vld [vmem:[%s1 + $0x364] sm:$0xf]
  %v281 = vld [vmem:[%s1 + $0x368] sm:$0xf]
  %v282 = vld [vmem:[%s1 + $0x36c] sm:$0xf]
  %v283 = vld [vmem:[%s1 + $0x370] sm:$0xf]
  %v284 = vld [vmem:[%s1 + $0x374] sm:$0xf]
  %v285 = vld [vmem:[%s1 + $0x378] sm:$0xf]
  %v286 = vld [vmem:[%s1 + $0x37c] sm:$0xf]
  %v287 = vld [vmem:[%s1 + $0x380] sm:$0x1]
  %v288 = vld [vmem:[%s2] sm:$0x1]
  %v290 = vlaneseq
  %v291 = vshrl.u32 %v290, 7
  %v292 = vsub.s32 0, %v291
  %v293 = vrot.slane %v288, %v292
  %v520 = vunpack.c.l.b16 %v63
  %v521 = vunpack.c.l.b16 %v64
  %v522 = vunpack.c.l.b16 %v65
  %v523 = vunpack.c.l.b16 %v66
  %v524 = vunpack.c.l.b16 %v67
  %v525 = vunpack.c.l.b16 %v68
  %v526 = vunpack.c.l.b16 %v69
  %v527 = vunpack.c.l.b16 %v70
  %v528 = vunpack.c.l.b16 %v71
  %v529 = vunpack.c.l.b16 %v72
  %v530 = vunpack.c.l.b16 %v73
  %v531 = vunpack.c.l.b16 %v74
  %v532 = vunpack.c.l.b16 %v75
  %v533 = vunpack.c.l.b16 %v76
  %v534 = vunpack.c.l.b16 %v77
  %v535 = vunpack.c.l.b16 %v78
  %v536 = vunpack.c.l.b16 %v79
  %v537 = vunpack.c.l.b16 %v80
  %v538 = vunpack.c.l.b16 %v81
  %v539 = vunpack.c.l.b16 %v82
  %v540 = vunpack.c.l.b16 %v83
  %v541 = vunpack.c.l.b16 %v84
  %v542 = vunpack.c.l.b16 %v85
  %v543 = vunpack.c.l.b16 %v86
  %v544 = vunpack.c.l.b16 %v87
  %v545 = vunpack.c.l.b16 %v88
  %v546 = vunpack.c.l.b16 %v89
  %v547 = vunpack.c.l.b16 %v90
  %v548 = vunpack.c.l.b16 %v91
  %v549 = vunpack.c.l.b16 %v92
  %v550 = vunpack.c.l.b16 %v93
  %v551 = vunpack.c.l.b16 %v94
  %v552 = vunpack.c.l.b16 %v95
  %v553 = vunpack.c.l.b16 %v96
  %v554 = vunpack.c.l.b16 %v97
  %v555 = vunpack.c.l.b16 %v98
  %v556 = vunpack.c.l.b16 %v99
  %v557 = vunpack.c.l.b16 %v100
  %v558 = vunpack.c.l.b16 %v101
  %v559 = vunpack.c.l.b16 %v102
  %v560 = vunpack.c.l.b16 %v103
  %v561 = vunpack.c.l.b16 %v104
  %v562 = vunpack.c.l.b16 %v105
  %v563 = vunpack.c.l.b16 %v106
  %v564 = vunpack.c.l.b16 %v107
  %v565 = vunpack.c.l.b16 %v108
  %v566 = vunpack.c.l.b16 %v109
  %v567 = vunpack.c.l.b16 %v110
  %v568 = vunpack.c.l.b16 %v111
  %v569 = vunpack.c.l.b16 %v112
  %v570 = vunpack.c.l.b16 %v113
  %v571 = vunpack.c.l.b16 %v114
  %v572 = vunpack.c.l.b16 %v115
  %v573 = vunpack.c.l.b16 %v116
  %v574 = vunpack.c.l.b16 %v117
  %v575 = vunpack.c.l.b16 %v118
  %v576 = vunpack.c.l.b16 %v119
  %v577 = vunpack.c.l.b16 %v120
  %v578 = vunpack.c.l.b16 %v121
  %v579 = vunpack.c.l.b16 %v122
  %v580 = vunpack.c.l.b16 %v123
  %v581 = vunpack.c.l.b16 %v124
  %v582 = vunpack.c.l.b16 %v125
  %v583 = vunpack.c.l.b16 %v126
  %v584 = vunpack.c.l.b16 %v127
  %v585 = vunpack.c.l.b16 %v128
  %v586 = vunpack.c.l.b16 %v129
  %v587 = vunpack.c.l.b16 %v130
  %v588 = vunpack.c.l.b16 %v131
  %v589 = vunpack.c.l.b16 %v132
  %v590 = vunpack.c.l.b16 %v133
  %v591 = vunpack.c.l.b16 %v134
  %v592 = vunpack.c.l.b16 %v135
  %v593 = vunpack.c.l.b16 %v136
  %v594 = vunpack.c.l.b16 %v137
  %v595 = vunpack.c.l.b16 %v138
  %v596 = vunpack.c.l.b16 %v139
  %v597 = vunpack.c.l.b16 %v140
  %v598 = vunpack.c.l.b16 %v141
  %v599 = vunpack.c.l.b16 %v142
  %v600 = vunpack.c.l.b16 %v143
  %v601 = vunpack.c.l.b16 %v144
  %v602 = vunpack.c.l.b16 %v145
  %v603 = vunpack.c.l.b16 %v146
  %v604 = vunpack.c.l.b16 %v147
  %v605 = vunpack.c.l.b16 %v148
  %v606 = vunpack.c.l.b16 %v149
  %v607 = vunpack.c.l.b16 %v150
  %v608 = vunpack.c.l.b16 %v151
  %v609 = vunpack.c.l.b16 %v152
  %v610 = vunpack.c.l.b16 %v153
  %v611 = vunpack.c.l.b16 %v154
  %v612 = vunpack.c.l.b16 %v155
  %v613 = vunpack.c.l.b16 %v156
  %v614 = vunpack.c.l.b16 %v157
  %v615 = vunpack.c.l.b16 %v158
  %v616 = vunpack.c.l.b16 %v159
  %v617 = vunpack.c.l.b16 %v160
  %v618 = vunpack.c.l.b16 %v161
  %v619 = vunpack.c.l.b16 %v162
  %v620 = vunpack.c.l.b16 %v163
  %v621 = vunpack.c.l.b16 %v164
  %v622 = vunpack.c.l.b16 %v165
  %v623 = vunpack.c.l.b16 %v166
  %v624 = vunpack.c.l.b16 %v167
  %v625 = vunpack.c.l.b16 %v168
  %v626 = vunpack.c.l.b16 %v169
  %v627 = vunpack.c.l.b16 %v170
  %v628 = vunpack.c.l.b16 %v171
  %v629 = vunpack.c.l.b16 %v172
  %v630 = vunpack.c.l.b16 %v173
  %v631 = vunpack.c.l.b16 %v174
  %v632 = vunpack.c.l.b16 %v175
  %v633 = vunpack.c.l.b16 %v176
  %v634 = vunpack.c.l.b16 %v177
  %v635 = vunpack.c.l.b16 %v178
  %v636 = vunpack.c.l.b16 %v179
  %v637 = vunpack.c.l.b16 %v180
  %v638 = vunpack.c.l.b16 %v181
  %v639 = vunpack.c.l.b16 %v182
  %v640 = vunpack.c.l.b16 %v183
  %v641 = vunpack.c.l.b16 %v184
  %v642 = vunpack.c.l.b16 %v185
  %v643 = vunpack.c.l.b16 %v186
  %v644 = vunpack.c.l.b16 %v187
  %v645 = vunpack.c.l.b16 %v188
  %v646 = vunpack.c.l.b16 %v189
  %v647 = vunpack.c.l.b16 %v190
  %v648 = vunpack.c.l.b16 %v191
  %v649 = vunpack.c.l.b16 %v192
  %v650 = vunpack.c.l.b16 %v193
  %v651 = vunpack.c.l.b16 %v194
  %v652 = vunpack.c.l.b16 %v195
  %v653 = vunpack.c.l.b16 %v196
  %v654 = vunpack.c.l.b16 %v197
  %v655 = vunpack.c.l.b16 %v198
  %v656 = vunpack.c.l.b16 %v199
  %v657 = vunpack.c.l.b16 %v200
  %v658 = vunpack.c.l.b16 %v201
  %v659 = vunpack.c.l.b16 %v202
  %v660 = vunpack.c.l.b16 %v203
  %v661 = vunpack.c.l.b16 %v204
  %v662 = vunpack.c.l.b16 %v205
  %v663 = vunpack.c.l.b16 %v206
  %v664 = vunpack.c.l.b16 %v207
  %v665 = vunpack.c.l.b16 %v208
  %v666 = vunpack.c.l.b16 %v209
  %v667 = vunpack.c.l.b16 %v210
  %v668 = vunpack.c.l.b16 %v211
  %v669 = vunpack.c.l.b16 %v212
  %v670 = vunpack.c.l.b16 %v213
  %v671 = vunpack.c.l.b16 %v214
  %v672 = vunpack.c.l.b16 %v215
  %v673 = vunpack.c.l.b16 %v216
  %v674 = vunpack.c.l.b16 %v217
  %v675 = vunpack.c.l.b16 %v218
  %v676 = vunpack.c.l.b16 %v219
  %v677 = vunpack.c.l.b16 %v220
  %v678 = vunpack.c.l.b16 %v221
  %v679 = vunpack.c.l.b16 %v222
  %v680 = vunpack.c.l.b16 %v223
  %v681 = vunpack.c.l.b16 %v224
  %v682 = vunpack.c.l.b16 %v225
  %v683 = vunpack.c.l.b16 %v226
  %v684 = vunpack.c.l.b16 %v227
  %v685 = vunpack.c.l.b16 %v228
  %v686 = vunpack.c.l.b16 %v229
  %v687 = vunpack.c.l.b16 %v230
  %v688 = vunpack.c.l.b16 %v231
  %v689 = vunpack.c.l.b16 %v232
  %v690 = vunpack.c.l.b16 %v233
  %v691 = vunpack.c.l.b16 %v234
  %v692 = vunpack.c.l.b16 %v235
  %v693 = vunpack.c.l.b16 %v236
  %v694 = vunpack.c.l.b16 %v237
  %v695 = vunpack.c.l.b16 %v238
  %v696 = vunpack.c.l.b16 %v239
  %v697 = vunpack.c.l.b16 %v240
  %v698 = vunpack.c.l.b16 %v241
  %v699 = vunpack.c.l.b16 %v242
  %v700 = vunpack.c.l.b16 %v243
  %v701 = vunpack.c.l.b16 %v244
  %v702 = vunpack.c.l.b16 %v245
  %v703 = vunpack.c.l.b16 %v246
  %v704 = vunpack.c.l.b16 %v247
  %v705 = vunpack.c.l.b16 %v248
  %v706 = vunpack.c.l.b16 %v249
  %v707 = vunpack.c.l.b16 %v250
  %v708 = vunpack.c.l.b16 %v251
  %v709 = vunpack.c.l.b16 %v252
  %v710 = vunpack.c.l.b16 %v253
  %v711 = vunpack.c.l.b16 %v254
  %v712 = vunpack.c.l.b16 %v255
  %v713 = vunpack.c.l.b16 %v256
  %v714 = vunpack.c.l.b16 %v257
  %v715 = vunpack.c.l.b16 %v258
  %v716 = vunpack.c.l.b16 %v259
  %v717 = vunpack.c.l.b16 %v260
  %v718 = vunpack.c.l.b16 %v261
  %v719 = vunpack.c.l.b16 %v262
  %v720 = vunpack.c.l.b16 %v263
  %v721 = vunpack.c.l.b16 %v264
  %v722 = vunpack.c.l.b16 %v265
  %v723 = vunpack.c.l.b16 %v266
  %v724 = vunpack.c.l.b16 %v267
  %v725 = vunpack.c.l.b16 %v268
  %v726 = vunpack.c.l.b16 %v269
  %v727 = vunpack.c.l.b16 %v270
  %v728 = vunpack.c.l.b16 %v271
  %v729 = vunpack.c.l.b16 %v272
  %v730 = vunpack.c.l.b16 %v273
  %v731 = vunpack.c.l.b16 %v274
  %v732 = vunpack.c.l.b16 %v275
  %v733 = vunpack.c.l.b16 %v276
  %v734 = vunpack.c.l.b16 %v277
  %v735 = vunpack.c.l.b16 %v278
  %v736 = vunpack.c.l.b16 %v279
  %v737 = vunpack.c.l.b16 %v280
  %v738 = vunpack.c.l.b16 %v281
  %v739 = vunpack.c.l.b16 %v282
  %v740 = vunpack.c.l.b16 %v283
  %v741 = vunpack.c.l.b16 %v284
  %v742 = vunpack.c.l.b16 %v285
  %v743 = vunpack.c.l.b16 %v286
  %v744 = vunpack.c.l.b16 %v287
  %v745 = vpack.c.b16 %v521, %v520
  %v746 = vpack.c.b16 %v523, %v522
  %v747 = vpack.c.b16 %v525, %v524
  %v748 = vpack.c.b16 %v527, %v526
  %v749 = vpack.c.b16 %v529, %v528
  %v750 = vpack.c.b16 %v531, %v530
  %v751 = vpack.c.b16 %v533, %v532
  %v752 = vpack.c.b16 %v535, %v534
  %v753 = vpack.c.b16 %v537, %v536
  %v754 = vpack.c.b16 %v539, %v538
  %v755 = vpack.c.b16 %v541, %v540
  %v756 = vpack.c.b16 %v543, %v542
  %v757 = vpack.c.b16 %v545, %v544
  %v758 = vpack.c.b16 %v547, %v546
  %v759 = vpack.c.b16 %v549, %v548
  %v760 = vpack.c.b16 %v551, %v550
  %v761 = vpack.c.b16 %v553, %v552
  %v762 = vpack.c.b16 %v555, %v554
  %v763 = vpack.c.b16 %v557, %v556
  %v764 = vpack.c.b16 %v559, %v558
  %v765 = vpack.c.b16 %v561, %v560
  %v766 = vpack.c.b16 %v563, %v562
  %v767 = vpack.c.b16 %v565, %v564
  %v768 = vpack.c.b16 %v567, %v566
  %v769 = vpack.c.b16 %v569, %v568
  %v770 = vpack.c.b16 %v571, %v570
  %v771 = vpack.c.b16 %v573, %v572
  %v772 = vpack.c.b16 %v575, %v574
  %v773 = vpack.c.b16 %v577, %v576
  %v774 = vpack.c.b16 %v579, %v578
  %v775 = vpack.c.b16 %v581, %v580
  %v776 = vpack.c.b16 %v583, %v582
  %v777 = vpack.c.b16 %v585, %v584
  %v778 = vpack.c.b16 %v587, %v586
  %v779 = vpack.c.b16 %v589, %v588
  %v780 = vpack.c.b16 %v591, %v590
  %v781 = vpack.c.b16 %v593, %v592
  %v782 = vpack.c.b16 %v595, %v594
  %v783 = vpack.c.b16 %v597, %v596
  %v784 = vpack.c.b16 %v599, %v598
  %v785 = vpack.c.b16 %v601, %v600
  %v786 = vpack.c.b16 %v603, %v602
  %v787 = vpack.c.b16 %v605, %v604
  %v788 = vpack.c.b16 %v607, %v606
  %v789 = vpack.c.b16 %v609, %v608
  %v790 = vpack.c.b16 %v611, %v610
  %v791 = vpack.c.b16 %v613, %v612
  %v792 = vpack.c.b16 %v615, %v614
  %v793 = vpack.c.b16 %v617, %v616
  %v794 = vpack.c.b16 %v619, %v618
  %v795 = vpack.c.b16 %v621, %v620
  %v796 = vpack.c.b16 %v623, %v622
  %v797 = vpack.c.b16 %v625, %v624
  %v798 = vpack.c.b16 %v627, %v626
  %v799 = vpack.c.b16 %v629, %v628
  %v800 = vpack.c.b16 %v631, %v630
  %v801 = vpack.c.b16 %v633, %v632
  %v802 = vpack.c.b16 %v635, %v634
  %v803 = vpack.c.b16 %v637, %v636
  %v804 = vpack.c.b16 %v639, %v638
  %v805 = vpack.c.b16 %v641, %v640
  %v806 = vpack.c.b16 %v643, %v642
  %v807 = vpack.c.b16 %v645, %v644
  %v808 = vpack.c.b16 %v647, %v646
  %v809 = vpack.c.b16 %v649, %v648
  %v810 = vpack.c.b16 %v651, %v650
  %v811 = vpack.c.b16 %v653, %v652
  %v812 = vpack.c.b16 %v655, %v654
  %v813 = vpack.c.b16 %v657, %v656
  %v814 = vpack.c.b16 %v659, %v658
  %v815 = vpack.c.b16 %v661, %v660
  %v816 = vpack.c.b16 %v663, %v662
  %v817 = vpack.c.b16 %v665, %v664
  %v818 = vpack.c.b16 %v667, %v666
  %v819 = vpack.c.b16 %v669, %v668
  %v820 = vpack.c.b16 %v671, %v670
  %v821 = vpack.c.b16 %v673, %v672
  %v822 = vpack.c.b16 %v675, %v674
  %v823 = vpack.c.b16 %v677, %v676
  %v824 = vpack.c.b16 %v679, %v678
  %v825 = vpack.c.b16 %v681, %v680
  %v826 = vpack.c.b16 %v683, %v682
  %v827 = vpack.c.b16 %v685, %v684
  %v828 = vpack.c.b16 %v687, %v686
  %v829 = vpack.c.b16 %v689, %v688
  %v830 = vpack.c.b16 %v691, %v690
  %v831 = vpack.c.b16 %v693, %v692
  %v832 = vpack.c.b16 %v695, %v694
  %v833 = vpack.c.b16 %v697, %v696
  %v834 = vpack.c.b16 %v699, %v698
  %v835 = vpack.c.b16 %v701, %v700
  %v836 = vpack.c.b16 %v703, %v702
  %v837 = vpack.c.b16 %v705, %v704
  %v838 = vpack.c.b16 %v707, %v706
  %v839 = vpack.c.b16 %v709, %v708
  %v840 = vpack.c.b16 %v711, %v710
  %v841 = vpack.c.b16 %v713, %v712
  %v842 = vpack.c.b16 %v715, %v714
  %v843 = vpack.c.b16 %v717, %v716
  %v844 = vpack.c.b16 %v719, %v718
  %v845 = vpack.c.b16 %v721, %v720
  %v846 = vpack.c.b16 %v723, %v722
  %v847 = vpack.c.b16 %v725, %v724
  %v848 = vpack.c.b16 %v727, %v726
  %v849 = vpack.c.b16 %v729, %v728
  %v850 = vpack.c.b16 %v731, %v730
  %v851 = vpack.c.b16 %v733, %v732
  %v852 = vpack.c.b16 %v735, %v734
  %v853 = vpack.c.b16 %v737, %v736
  %v854 = vpack.c.b16 %v739, %v738
  %v855 = vpack.c.b16 %v741, %v740
  %v856 = vpack.c.b16 %v743, %v742
  %v857 = vpack.c.b16 %v744, %v744
  %vm970 = vcmask 7168
  %v972 = vsel %vm970, %v62, 0
  %vm974 = vcmask 1040384
  %v975 = vsel 0, 4294967295, 65535
  %v976 = vsel %vm974, %v975, 0
  %v978 = vand.u32 %v857, %v976
  %980 = vmatprep.subr.bf16.mxu0 0
  %981 = vmatpush1.bf16.msra.mxu0 %v752
  %982 = vmatprep.subr.bf16.mxu0 0
  %983 = vmatpush1.bf16.msra.mxu0 %v751
  %984 = vmatprep.subr.bf16.mxu0 0
  %985 = vmatpush1.bf16.msra.mxu0 %v750
  %986 = vmatprep.subr.bf16.mxu0 0
  %987 = vmatpush1.bf16.msra.mxu0 %v749
  %988 = vmatprep.subr.bf16.mxu0 0
  %989 = vmatpush1.bf16.msra.mxu0 %v748
  %990 = vmatprep.subr.bf16.mxu0 0
  %991 = vmatpush1.bf16.msra.mxu0 %v747
  %992 = vmatprep.subr.bf16.mxu0 0
  %993 = vmatpush1.bf16.msra.mxu0 %v746
  %994 = vmatprep.subr.bf16.mxu0 0
  %995 = vmatpush1.bf16.msra.mxu0 %v745
  %996 = vmatprep.subr.bf16.mxu0 0
  %997 = vmatpush2.bf16.msra.mxu0 %v760
  %998 = vmatprep.subr.bf16.mxu0 0
  %999 = vmatpush2.bf16.msra.mxu0 %v759
  %1000 = vmatprep.subr.bf16.mxu0 0
  %1001 = vmatpush2.bf16.msra.mxu0 %v758
  %1002 = vmatprep.subr.bf16.mxu0 0
  %1003 = vmatpush2.bf16.msra.mxu0 %v757
  %1004 = vmatprep.subr.bf16.mxu0 0
  %1005 = vmatpush2.bf16.msra.mxu0 %v756
  %1006 = vmatprep.subr.bf16.mxu0 0
  %1007 = vmatpush2.bf16.msra.mxu0 %v755
  %1008 = vmatprep.subr.bf16.mxu0 0
  %1009 = vmatpush2.bf16.msra.mxu0 %v754
  %1010 = vmatprep.subr.bf16.mxu0 0
  %1011 = vmatpush2.bf16.msra.mxu0 %v753
  %1012 = vmatprep.mubr.bf16.mxu0 %v49
  %1013 = vmatmul.mubr.bf16.gmra.mxu0 %v48
  %v1014 = vpop.f32.mrf.mxu0
  %v1015 = vadd.f32 %v293, %v1014
  %v1016 = vpop.f32.mrf.mxu0
  %v1017 = vpop.f32.mrf.mxu0
  %v1018 = vpop.f32.mrf.mxu0
  %1019 = vdwg.mxu0
  %1020 = vmatprep.subr.bf16.mxu0 0
  %1021 = vmatpush1.bf16.msra.mxu0 %v768
  %1022 = vmatprep.subr.bf16.mxu0 0
  %1023 = vmatpush1.bf16.msra.mxu0 %v767
  %1024 = vmatprep.subr.bf16.mxu0 0
  %1025 = vmatpush1.bf16.msra.mxu0 %v766
  %1026 = vmatprep.subr.bf16.mxu0 0
  %1027 = vmatpush1.bf16.msra.mxu0 %v765
  %1028 = vmatprep.subr.bf16.mxu0 0
  %1029 = vmatpush1.bf16.msra.mxu0 %v764
  %1030 = vmatprep.subr.bf16.mxu0 0
  %1031 = vmatpush1.bf16.msra.mxu0 %v763
  %1032 = vmatprep.subr.bf16.mxu0 0
  %1033 = vmatpush1.bf16.msra.mxu0 %v762
  %1034 = vmatprep.subr.bf16.mxu0 0
  %1035 = vmatpush1.bf16.msra.mxu0 %v761
  %1036 = vmatprep.subr.bf16.mxu0 0
  %1037 = vmatpush2.bf16.msra.mxu0 %v776
  %1038 = vmatprep.subr.bf16.mxu0 0
  %1039 = vmatpush2.bf16.msra.mxu0 %v775
  %1040 = vmatprep.subr.bf16.mxu0 0
  %1041 = vmatpush2.bf16.msra.mxu0 %v774
  %1042 = vmatprep.subr.bf16.mxu0 0
  %1043 = vmatpush2.bf16.msra.mxu0 %v773
  %1044 = vmatprep.subr.bf16.mxu0 0
  %1045 = vmatpush2.bf16.msra.mxu0 %v772
  %1046 = vmatprep.subr.bf16.mxu0 0
  %1047 = vmatpush2.bf16.msra.mxu0 %v771
  %1048 = vmatprep.subr.bf16.mxu0 0
  %1049 = vmatpush2.bf16.msra.mxu0 %v770
  %1050 = vmatprep.subr.bf16.mxu0 0
  %1051 = vmatpush2.bf16.msra.mxu0 %v769
  %1052 = vmatprep.mubr.bf16.mxu0 %v51
  %1053 = vmatmul.mubr.bf16.gmra.mxu0 %v50
  %v1054 = vpop.f32.mrf.mxu0
  %v1055 = vadd.f32 %v1015, %v1054
  %v1056 = vpop.f32.mrf.mxu0
  %v1057 = vpop.f32.mrf.mxu0
  %v1058 = vpop.f32.mrf.mxu0
  %1059 = vdwg.mxu0
  %1060 = vmatprep.subr.bf16.mxu0 0
  %1061 = vmatpush1.bf16.msra.mxu0 %v784
  %1062 = vmatprep.subr.bf16.mxu0 0
  %1063 = vmatpush1.bf16.msra.mxu0 %v783
  %1064 = vmatprep.subr.bf16.mxu0 0
  %1065 = vmatpush1.bf16.msra.mxu0 %v782
  %1066 = vmatprep.subr.bf16.mxu0 0
  %1067 = vmatpush1.bf16.msra.mxu0 %v781
  %1068 = vmatprep.subr.bf16.mxu0 0
  %1069 = vmatpush1.bf16.msra.mxu0 %v780
  %1070 = vmatprep.subr.bf16.mxu0 0
  %1071 = vmatpush1.bf16.msra.mxu0 %v779
  %1072 = vmatprep.subr.bf16.mxu0 0
  %1073 = vmatpush1.bf16.msra.mxu0 %v778
  %1074 = vmatprep.subr.bf16.mxu0 0
  %1075 = vmatpush1.bf16.msra.mxu0 %v777
  %1076 = vmatprep.subr.bf16.mxu0 0
  %1077 = vmatpush2.bf16.msra.mxu0 %v792
  %1078 = vmatprep.subr.bf16.mxu0 0
  %1079 = vmatpush2.bf16.msra.mxu0 %v791
  %1080 = vmatprep.subr.bf16.mxu0 0
  %1081 = vmatpush2.bf16.msra.mxu0 %v790
  %1082 = vmatprep.subr.bf16.mxu0 0
  %1083 = vmatpush2.bf16.msra.mxu0 %v789
  %1084 = vmatprep.subr.bf16.mxu0 0
  %1085 = vmatpush2.bf16.msra.mxu0 %v788
  %1086 = vmatprep.subr.bf16.mxu0 0
  %1087 = vmatpush2.bf16.msra.mxu0 %v787
  %1088 = vmatprep.subr.bf16.mxu0 0
  %1089 = vmatpush2.bf16.msra.mxu0 %v786
  %1090 = vmatprep.subr.bf16.mxu0 0
  %1091 = vmatpush2.bf16.msra.mxu0 %v785
  %1092 = vmatprep.mubr.bf16.mxu0 %v53
  %1093 = vmatmul.mubr.bf16.gmra.mxu0 %v52
  %v1094 = vpop.f32.mrf.mxu0
  %v1095 = vadd.f32 %v1055, %v1094
  %v1096 = vpop.f32.mrf.mxu0
  %v1097 = vpop.f32.mrf.mxu0
  %v1098 = vpop.f32.mrf.mxu0
  %1099 = vdwg.mxu0
  %1100 = vmatprep.subr.bf16.mxu0 0
  %1101 = vmatpush1.bf16.msra.mxu0 %v800
  %1102 = vmatprep.subr.bf16.mxu0 0
  %1103 = vmatpush1.bf16.msra.mxu0 %v799
  %1104 = vmatprep.subr.bf16.mxu0 0
  %1105 = vmatpush1.bf16.msra.mxu0 %v798
  %1106 = vmatprep.subr.bf16.mxu0 0
  %1107 = vmatpush1.bf16.msra.mxu0 %v797
  %1108 = vmatprep.subr.bf16.mxu0 0
  %1109 = vmatpush1.bf16.msra.mxu0 %v796
  %1110 = vmatprep.subr.bf16.mxu0 0
  %1111 = vmatpush1.bf16.msra.mxu0 %v795
  %1112 = vmatprep.subr.bf16.mxu0 0
  %1113 = vmatpush1.bf16.msra.mxu0 %v794
  %1114 = vmatprep.subr.bf16.mxu0 0
  %1115 = vmatpush1.bf16.msra.mxu0 %v793
  %1116 = vmatprep.subr.bf16.mxu0 0
  %1117 = vmatpush2.bf16.msra.mxu0 %v808
  %1118 = vmatprep.subr.bf16.mxu0 0
  %1119 = vmatpush2.bf16.msra.mxu0 %v807
  %1120 = vmatprep.subr.bf16.mxu0 0
  %1121 = vmatpush2.bf16.msra.mxu0 %v806
  %1122 = vmatprep.subr.bf16.mxu0 0
  %1123 = vmatpush2.bf16.msra.mxu0 %v805
  %1124 = vmatprep.subr.bf16.mxu0 0
  %1125 = vmatpush2.bf16.msra.mxu0 %v804
  %1126 = vmatprep.subr.bf16.mxu0 0
  %1127 = vmatpush2.bf16.msra.mxu0 %v803
  %1128 = vmatprep.subr.bf16.mxu0 0
  %1129 = vmatpush2.bf16.msra.mxu0 %v802
  %1130 = vmatprep.subr.bf16.mxu0 0
  %1131 = vmatpush2.bf16.msra.mxu0 %v801
  %1132 = vmatprep.mubr.bf16.mxu0 %v55
  %1133 = vmatmul.mubr.bf16.gmra.mxu0 %v54
  %v1134 = vpop.f32.mrf.mxu0
  %v1135 = vadd.f32 %v1095, %v1134
  %v1136 = vpop.f32.mrf.mxu0
  %v1137 = vpop.f32.mrf.mxu0
  %v1138 = vpop.f32.mrf.mxu0
  %1139 = vdwg.mxu0
  %1140 = vmatprep.subr.bf16.mxu0 0
  %1141 = vmatpush1.bf16.msra.mxu0 %v816
  %1142 = vmatprep.subr.bf16.mxu0 0
  %1143 = vmatpush1.bf16.msra.mxu0 %v815
  %1144 = vmatprep.subr.bf16.mxu0 0
  %1145 = vmatpush1.bf16.msra.mxu0 %v814
  %1146 = vmatprep.subr.bf16.mxu0 0
  %1147 = vmatpush1.bf16.msra.mxu0 %v813
  %1148 = vmatprep.subr.bf16.mxu0 0
  %1149 = vmatpush1.bf16.msra.mxu0 %v812
  %1150 = vmatprep.subr.bf16.mxu0 0
  %1151 = vmatpush1.bf16.msra.mxu0 %v811
  %1152 = vmatprep.subr.bf16.mxu0 0
  %1153 = vmatpush1.bf16.msra.mxu0 %v810
  %1154 = vmatprep.subr.bf16.mxu0 0
  %1155 = vmatpush1.bf16.msra.mxu0 %v809
  %1156 = vmatprep.subr.bf16.mxu0 0
  %1157 = vmatpush2.bf16.msra.mxu0 %v824
  %1158 = vmatprep.subr.bf16.mxu0 0
  %1159 = vmatpush2.bf16.msra.mxu0 %v823
  %1160 = vmatprep.subr.bf16.mxu0 0
  %1161 = vmatpush2.bf16.msra.mxu0 %v822
  %1162 = vmatprep.subr.bf16.mxu0 0
  %1163 = vmatpush2.bf16.msra.mxu0 %v821
  %1164 = vmatprep.subr.bf16.mxu0 0
  %1165 = vmatpush2.bf16.msra.mxu0 %v820
  %1166 = vmatprep.subr.bf16.mxu0 0
  %1167 = vmatpush2.bf16.msra.mxu0 %v819
  %1168 = vmatprep.subr.bf16.mxu0 0
  %1169 = vmatpush2.bf16.msra.mxu0 %v818
  %1170 = vmatprep.subr.bf16.mxu0 0
  %1171 = vmatpush2.bf16.msra.mxu0 %v817
  %1172 = vmatprep.mubr.bf16.mxu0 %v57
  %1173 = vmatmul.mubr.bf16.gmra.mxu0 %v56
  %v1174 = vpop.f32.mrf.mxu0
  %v1175 = vadd.f32 %v1135, %v1174
  %v1176 = vpop.f32.mrf.mxu0
  %v1177 = vpop.f32.mrf.mxu0
  %v1178 = vpop.f32.mrf.mxu0
  %1179 = vdwg.mxu0
  %1180 = vmatprep.subr.bf16.mxu0 0
  %1181 = vmatpush1.bf16.msra.mxu0 %v832
  %1182 = vmatprep.subr.bf16.mxu0 0
  %1183 = vmatpush1.bf16.msra.mxu0 %v831
  %1184 = vmatprep.subr.bf16.mxu0 0
  %1185 = vmatpush1.bf16.msra.mxu0 %v830
  %1186 = vmatprep.subr.bf16.mxu0 0
  %1187 = vmatpush1.bf16.msra.mxu0 %v829
  %1188 = vmatprep.subr.bf16.mxu0 0
  %1189 = vmatpush1.bf16.msra.mxu0 %v828
  %1190 = vmatprep.subr.bf16.mxu0 0
  %1191 = vmatpush1.bf16.msra.mxu0 %v827
  %1192 = vmatprep.subr.bf16.mxu0 0
  %1193 = vmatpush1.bf16.msra.mxu0 %v826
  %1194 = vmatprep.subr.bf16.mxu0 0
  %1195 = vmatpush1.bf16.msra.mxu0 %v825
  %1196 = vmatprep.subr.bf16.mxu0 0
  %1197 = vmatpush2.bf16.msra.mxu0 %v840
  %1198 = vmatprep.subr.bf16.mxu0 0
  %1199 = vmatpush2.bf16.msra.mxu0 %v839
  %1200 = vmatprep.subr.bf16.mxu0 0
  %1201 = vmatpush2.bf16.msra.mxu0 %v838
  %1202 = vmatprep.subr.bf16.mxu0 0
  %1203 = vmatpush2.bf16.msra.mxu0 %v837
  %1204 = vmatprep.subr.bf16.mxu0 0
  %1205 = vmatpush2.bf16.msra.mxu0 %v836
  %1206 = vmatprep.subr.bf16.mxu0 0
  %1207 = vmatpush2.bf16.msra.mxu0 %v835
  %1208 = vmatprep.subr.bf16.mxu0 0
  %1209 = vmatpush2.bf16.msra.mxu0 %v834
  %1210 = vmatprep.subr.bf16.mxu0 0
  %1211 = vmatpush2.bf16.msra.mxu0 %v833
  %1212 = vmatprep.mubr.bf16.mxu0 %v59
  %1213 = vmatmul.mubr.bf16.gmra.mxu0 %v58
  %v1214 = vpop.f32.mrf.mxu0
  %v1215 = vadd.f32 %v1175, %v1214
  %v1216 = vpop.f32.mrf.mxu0
  %v1217 = vpop.f32.mrf.mxu0
  %v1218 = vpop.f32.mrf.mxu0
  %1219 = vdwg.mxu0
  %1220 = vmatprep.subr.bf16.mxu0 0
  %1221 = vmatpush1.bf16.msra.mxu0 %v848
  %1222 = vmatprep.subr.bf16.mxu0 0
  %1223 = vmatpush1.bf16.msra.mxu0 %v847
  %1224 = vmatprep.subr.bf16.mxu0 0
  %1225 = vmatpush1.bf16.msra.mxu0 %v846
  %1226 = vmatprep.subr.bf16.mxu0 0
  %1227 = vmatpush1.bf16.msra.mxu0 %v845
  %1228 = vmatprep.subr.bf16.mxu0 0
  %1229 = vmatpush1.bf16.msra.mxu0 %v844
  %1230 = vmatprep.subr.bf16.mxu0 0
  %1231 = vmatpush1.bf16.msra.mxu0 %v843
  %1232 = vmatprep.subr.bf16.mxu0 0
  %1233 = vmatpush1.bf16.msra.mxu0 %v842
  %1234 = vmatprep.subr.bf16.mxu0 0
  %1235 = vmatpush1.bf16.msra.mxu0 %v841
  %1236 = vmatprep.subr.bf16.mxu0 0
  %1237 = vmatpush2.bf16.msra.mxu0 %v856
  %1238 = vmatprep.subr.bf16.mxu0 0
  %1239 = vmatpush2.bf16.msra.mxu0 %v855
  %1240 = vmatprep.subr.bf16.mxu0 0
  %1241 = vmatpush2.bf16.msra.mxu0 %v854
  %1242 = vmatprep.subr.bf16.mxu0 0
  %1243 = vmatpush2.bf16.msra.mxu0 %v853
  %1244 = vmatprep.subr.bf16.mxu0 0
  %1245 = vmatpush2.bf16.msra.mxu0 %v852
  %1246 = vmatprep.subr.bf16.mxu0 0
  %1247 = vmatpush2.bf16.msra.mxu0 %v851
  %1248 = vmatprep.subr.bf16.mxu0 0
  %1249 = vmatpush2.bf16.msra.mxu0 %v850
  %1250 = vmatprep.subr.bf16.mxu0 0
  %1251 = vmatpush2.bf16.msra.mxu0 %v849
  %1252 = vmatprep.mubr.bf16.mxu0 %v61
  %1253 = vmatmul.mubr.bf16.gmra.mxu0 %v60
  %v1254 = vpop.f32.mrf.mxu0
  %v1255 = vadd.f32 %v1215, %v1254
  %v1256 = vpop.f32.mrf.mxu0
  %v1257 = vpop.f32.mrf.mxu0
  %v1258 = vpop.f32.mrf.mxu0
  %1259 = vdwg.mxu0
  %1260 = vmatprep.subr.bf16.mxu0 0
  %1261 = vmatpush1.bf16.msra.mxu0 0
  %1262 = vmatprep.subr.bf16.mxu0 0
  %1263 = vmatpush1.bf16.msra.mxu0 0
  %1264 = vmatprep.subr.bf16.mxu0 0
  %1265 = vmatpush1.bf16.msra.mxu0 0
  %1266 = vmatprep.subr.bf16.mxu0 0
  %1267 = vmatpush1.bf16.msra.mxu0 0
  %1268 = vmatprep.subr.bf16.mxu0 0
  %1269 = vmatpush1.bf16.msra.mxu0 0
  %1270 = vmatprep.subr.bf16.mxu0 0
  %1271 = vmatpush1.bf16.msra.mxu0 0
  %1272 = vmatprep.subr.bf16.mxu0 0
  %1273 = vmatpush1.bf16.msra.mxu0 0
  %1274 = vmatprep.subr.bf16.mxu0 0
  %1275 = vmatpush1.bf16.msra.mxu0 %v978
  %1276 = vmatprep.subr.bf16.mxu0 0
  %1277 = vmatpush2.bf16.msra.mxu0 0
  %1278 = vmatprep.subr.bf16.mxu0 0
  %1279 = vmatpush2.bf16.msra.mxu0 0
  %1280 = vmatprep.subr.bf16.mxu0 0
  %1281 = vmatpush2.bf16.msra.mxu0 0
  %1282 = vmatprep.subr.bf16.mxu0 0
  %1283 = vmatpush2.bf16.msra.mxu0 0
  %1284 = vmatprep.subr.bf16.mxu0 0
  %1285 = vmatpush2.bf16.msra.mxu0 0
  %1286 = vmatprep.subr.bf16.mxu0 0
  %1287 = vmatpush2.bf16.msra.mxu0 0
  %1288 = vmatprep.subr.bf16.mxu0 0
  %1289 = vmatpush2.bf16.msra.mxu0 0
  %1290 = vmatprep.subr.bf16.mxu0 0
  %1291 = vmatpush2.bf16.msra.mxu0 0
  %1292 = vmatprep.mubr.bf16.mxu0 0
  %1293 = vmatmul.mubr.bf16.gmra.mxu0 %v972
  %v1294 = vpop.f32.mrf.mxu0
  %v1295 = vadd.f32 %v1255, %v1294
  %v1296 = vpop.f32.mrf.mxu0
  %v1297 = vpop.f32.mrf.mxu0
  %v1298 = vpop.f32.mrf.mxu0
  %1299 = vdwg.mxu0
  %v1300 = vmax.f32 %v1295, 0.0
  %v1301 = vpack.c.bf16 %v1300, %v1300
  %v1302 = vld [vmem:[%s3] sm:$0xf]
  %v1303 = vld [vmem:[%s3 + $0x4] sm:$0xf]
  %v1304 = vld [vmem:[%s3 + $0x8] sm:$0xf]
  %v1305 = vld [vmem:[%s3 + $0xc] sm:$0xf]
  %v1306 = vld [vmem:[%s3 + $0x10] sm:$0xf]
  %v1307 = vld [vmem:[%s3 + $0x14] sm:$0xf]
  %v1308 = vld [vmem:[%s3 + $0x18] sm:$0xf]
  %v1309 = vld [vmem:[%s3 + $0x1c] sm:$0xf]
  %v1310 = vld [vmem:[%s3 + $0x20] sm:$0xf]
  %v1311 = vld [vmem:[%s3 + $0x24] sm:$0xf]
  %v1312 = vld [vmem:[%s3 + $0x28] sm:$0xf]
  %v1313 = vld [vmem:[%s3 + $0x2c] sm:$0xf]
  %v1314 = vld [vmem:[%s3 + $0x30] sm:$0xf]
  %v1315 = vld [vmem:[%s3 + $0x34] sm:$0xf]
  %v1316 = vld [vmem:[%s3 + $0x38] sm:$0xf]
  %v1317 = vld [vmem:[%s3 + $0x3c] sm:$0xf]
  %v1318 = vld [vmem:[%s4] sm:$0x1]
  %v1320 = vlaneseq
  %v1321 = vshrl.u32 %v1320, 7
  %v1322 = vsub.s32 0, %v1321
  %v1323 = vrot.slane %v1318, %v1322
  %v1341 = vunpack.c.l.b16 %v1302
  %v1342 = vunpack.c.l.b16 %v1303
  %v1343 = vunpack.c.l.b16 %v1304
  %v1344 = vunpack.c.l.b16 %v1305
  %v1345 = vunpack.c.l.b16 %v1306
  %v1346 = vunpack.c.l.b16 %v1307
  %v1347 = vunpack.c.l.b16 %v1308
  %v1348 = vunpack.c.l.b16 %v1309
  %v1349 = vunpack.c.l.b16 %v1310
  %v1350 = vunpack.c.l.b16 %v1311
  %v1351 = vunpack.c.l.b16 %v1312
  %v1352 = vunpack.c.l.b16 %v1313
  %v1353 = vunpack.c.l.b16 %v1314
  %v1354 = vunpack.c.l.b16 %v1315
  %v1355 = vunpack.c.l.b16 %v1316
  %v1356 = vunpack.c.l.b16 %v1317
  %v1357 = vpack.c.b16 %v1342, %v1341
  %v1358 = vpack.c.b16 %v1344, %v1343
  %v1359 = vpack.c.b16 %v1346, %v1345
  %v1360 = vpack.c.b16 %v1348, %v1347
  %v1361 = vpack.c.b16 %v1350, %v1349
  %v1362 = vpack.c.b16 %v1352, %v1351
  %v1363 = vpack.c.b16 %v1354, %v1353
  %v1364 = vpack.c.b16 %v1356, %v1355
  %1373 = vmatprep.subr.bf16.mxu0 0
  %1374 = vmatpush1.bf16.msra.mxu0 %v1364
  %1375 = vmatprep.subr.bf16.mxu0 0
  %1376 = vmatpush1.bf16.msra.mxu0 %v1363
  %1377 = vmatprep.subr.bf16.mxu0 0
  %1378 = vmatpush1.bf16.msra.mxu0 %v1362
  %1379 = vmatprep.subr.bf16.mxu0 0
  %1380 = vmatpush1.bf16.msra.mxu0 %v1361
  %1381 = vmatprep.subr.bf16.mxu0 0
  %1382 = vmatpush1.bf16.msra.mxu0 %v1360
  %1383 = vmatprep.subr.bf16.mxu0 0
  %1384 = vmatpush1.bf16.msra.mxu0 %v1359
  %1385 = vmatprep.subr.bf16.mxu0 0
  %1386 = vmatpush1.bf16.msra.mxu0 %v1358
  %1387 = vmatprep.subr.bf16.mxu0 0
  %1388 = vmatpush1.bf16.msra.mxu0 %v1357
  %1389 = vmatprep.subr.bf16.mxu0 0
  %1390 = vmatpush2.bf16.msra.mxu0 0
  %1391 = vmatprep.subr.bf16.mxu0 0
  %1392 = vmatpush2.bf16.msra.mxu0 0
  %1393 = vmatprep.subr.bf16.mxu0 0
  %1394 = vmatpush2.bf16.msra.mxu0 0
  %1395 = vmatprep.subr.bf16.mxu0 0
  %1396 = vmatpush2.bf16.msra.mxu0 0
  %1397 = vmatprep.subr.bf16.mxu0 0
  %1398 = vmatpush2.bf16.msra.mxu0 0
  %1399 = vmatprep.subr.bf16.mxu0 0
  %1400 = vmatpush2.bf16.msra.mxu0 0
  %1401 = vmatprep.subr.bf16.mxu0 0
  %1402 = vmatpush2.bf16.msra.mxu0 0
  %1403 = vmatprep.subr.bf16.mxu0 0
  %1404 = vmatpush2.bf16.msra.mxu0 0
  %1405 = vmatprep.mubr.bf16.mxu0 0
  %1406 = vmatmul.mubr.bf16.gmra.mxu0 %v1301
  %v1407 = vpop.f32.mrf.mxu0
  %v1408 = vadd.f32 %v1323, %v1407
  %v1409 = vpop.f32.mrf.mxu0
  %v1410 = vpop.f32.mrf.mxu0
  %v1411 = vpop.f32.mrf.mxu0
  %1412 = vdwg.mxu0
  %v1413 = vmax.f32 %v1408, 0.0
  %v1414 = vpack.c.bf16 %v1413, %v1413
  %v1415 = vld [vmem:[%s5] sm:$0xf]
  %v1416 = vld [vmem:[%s5 + $0x4] sm:$0xf]
  %v1417 = vld [vmem:[%s5 + $0x8] sm:$0xf]
  %v1418 = vld [vmem:[%s5 + $0xc] sm:$0xf]
  %v1419 = vld [vmem:[%s6] sm:$0x1]
  %v1421 = vlaneseq
  %v1422 = vshrl.u32 %v1421, 7
  %v1423 = vsub.s32 0, %v1422
  %v1424 = vrot.slane %v1419, %v1423
  %v1430 = vunpack.c.l.b16 %v1415
  %v1431 = vunpack.c.l.b16 %v1416
  %v1432 = vunpack.c.l.b16 %v1417
  %v1433 = vunpack.c.l.b16 %v1418
  %v1434 = vpack.c.b16 %v1431, %v1430
  %v1435 = vpack.c.b16 %v1433, %v1432
  %vm1438 = vcmask 261120
  %v1440 = vsel %vm1438, %v1414, 0
  %1442 = vmatprep.subr.bf16.mxu0 0
  %1443 = vmatpush1.bf16.msra.mxu0 0
  %1444 = vmatprep.subr.bf16.mxu0 0
  %1445 = vmatpush1.bf16.msra.mxu0 0
  %1446 = vmatprep.subr.bf16.mxu0 0
  %1447 = vmatpush1.bf16.msra.mxu0 0
  %1448 = vmatprep.subr.bf16.mxu0 0
  %1449 = vmatpush1.bf16.msra.mxu0 0
  %1450 = vmatprep.subr.bf16.mxu0 0
  %1451 = vmatpush1.bf16.msra.mxu0 0
  %1452 = vmatprep.subr.bf16.mxu0 0
  %1453 = vmatpush1.bf16.msra.mxu0 0
  %1454 = vmatprep.subr.bf16.mxu0 0
  %1455 = vmatpush1.bf16.msra.mxu0 %v1435
  %1456 = vmatprep.subr.bf16.mxu0 0
  %1457 = vmatpush1.bf16.msra.mxu0 %v1434
  %1458 = vmatprep.subr.bf16.mxu0 0
  %1459 = vmatpush2.bf16.msra.mxu0 0
  %1460 = vmatprep.subr.bf16.mxu0 0
  %1461 = vmatpush2.bf16.msra.mxu0 0
  %1462 = vmatprep.subr.bf16.mxu0 0
  %1463 = vmatpush2.bf16.msra.mxu0 0
  %1464 = vmatprep.subr.bf16.mxu0 0
  %1465 = vmatpush2.bf16.msra.mxu0 0
  %1466 = vmatprep.subr.bf16.mxu0 0
  %1467 = vmatpush2.bf16.msra.mxu0 0
  %1468 = vmatprep.subr.bf16.mxu0 0
  %1469 = vmatpush2.bf16.msra.mxu0 0
  %1470 = vmatprep.subr.bf16.mxu0 0
  %1471 = vmatpush2.bf16.msra.mxu0 0
  %1472 = vmatprep.subr.bf16.mxu0 0
  %1473 = vmatpush2.bf16.msra.mxu0 0
  %1474 = vmatprep.mubr.bf16.mxu0 0
  %1475 = vmatmul.mubr.bf16.gmra.mxu0 %v1440
  %v1476 = vpop.f32.mrf.mxu0
  %v1477 = vadd.f32 %v1424, %v1476
  %v1478 = vpop.f32.mrf.mxu0
  %v1479 = vpop.f32.mrf.mxu0
  %v1480 = vpop.f32.mrf.mxu0
  %1481 = vdwg.mxu0
  %v1482 = vmax.f32 %v1477, 0.0
  %v1483 = vpack.c.bf16 %v1482, %v1482
  %v1484 = vld [vmem:[%s7] sm:$0xf]
  %v1485 = vld [vmem:[%s7 + $0x4] sm:$0xf]
  %v1486 = vld [vmem:[%s7 + $0x8] sm:$0xf]
  %v1487 = vld [vmem:[%s7 + $0xc] sm:$0xf]
  %v1488 = vld [vmem:[%s8] sm:$0x1]
  %v1490 = vlaneseq
  %v1491 = vshrl.u32 %v1490, 7
  %v1492 = vsub.s32 0, %v1491
  %v1493 = vrot.slane %v1488, %v1492
  %v1499 = vunpack.c.l.b16 %v1484
  %v1500 = vunpack.c.l.b16 %v1485
  %v1501 = vunpack.c.l.b16 %v1486
  %v1502 = vunpack.c.l.b16 %v1487
  %v1503 = vpack.c.b16 %v1500, %v1499
  %v1504 = vpack.c.b16 %v1502, %v1501
  %v1508 = vsel %vm1438, %v1483, 0
  %1510 = vmatprep.subr.bf16.mxu0 0
  %1511 = vmatpush1.bf16.msra.mxu0 0
  %1512 = vmatprep.subr.bf16.mxu0 0
  %1513 = vmatpush1.bf16.msra.mxu0 0
  %1514 = vmatprep.subr.bf16.mxu0 0
  %1515 = vmatpush1.bf16.msra.mxu0 0
  %1516 = vmatprep.subr.bf16.mxu0 0
  %1517 = vmatpush1.bf16.msra.mxu0 0
  %1518 = vmatprep.subr.bf16.mxu0 0
  %1519 = vmatpush1.bf16.msra.mxu0 0
  %1520 = vmatprep.subr.bf16.mxu0 0
  %1521 = vmatpush1.bf16.msra.mxu0 0
  %1522 = vmatprep.subr.bf16.mxu0 0
  %1523 = vmatpush1.bf16.msra.mxu0 %v1504
  %1524 = vmatprep.subr.bf16.mxu0 0
  %1525 = vmatpush1.bf16.msra.mxu0 %v1503
  %1526 = vmatprep.subr.bf16.mxu0 0
  %1527 = vmatpush2.bf16.msra.mxu0 0
  %1528 = vmatprep.subr.bf16.mxu0 0
  %1529 = vmatpush2.bf16.msra.mxu0 0
  %1530 = vmatprep.subr.bf16.mxu0 0
  %1531 = vmatpush2.bf16.msra.mxu0 0
  %1532 = vmatprep.subr.bf16.mxu0 0
  %1533 = vmatpush2.bf16.msra.mxu0 0
  %1534 = vmatprep.subr.bf16.mxu0 0
  %1535 = vmatpush2.bf16.msra.mxu0 0
  %1536 = vmatprep.subr.bf16.mxu0 0
  %1537 = vmatpush2.bf16.msra.mxu0 0
  %1538 = vmatprep.subr.bf16.mxu0 0
  %1539 = vmatpush2.bf16.msra.mxu0 0
  %1540 = vmatprep.subr.bf16.mxu0 0
  %1541 = vmatpush2.bf16.msra.mxu0 0
  %1542 = vmatprep.mubr.bf16.mxu0 0
  %1543 = vmatmul.mubr.bf16.gmra.mxu0 %v1508
  %v1544 = vpop.f32.mrf.mxu0
  %v1545 = vadd.f32 %v1493, %v1544
  %v1546 = vpop.f32.mrf.mxu0
  %v1547 = vpop.f32.mrf.mxu0
  %v1548 = vpop.f32.mrf.mxu0
  %1549 = vdwg.mxu0
  %vm1550 = vcmask 64512
  %1551 = vst.msk [vmem:[%s9] sm:$0xff] %vm1550, %v1545
  // Predicated region
  $region38: #{nnue_forward.1} parent=0 // pred_check
    _
  $region39: #{nnue_forward.1} parent=0 // pred_check_branch
    %1553 = sbr.rel (0) target = $region41
  $region40: #{nnue_forward.1} parent=0 // pred_region
    _
  $region41: #{nnue_forward.1} parent=0 // pred_fallthru
    _
  // Predicated region
  $region42: #{nnue_forward.1} parent=0 // pred_check
    _
  $region43: #{nnue_forward.1} parent=0 // pred_check_branch
    %1555 = sbr.rel (0) target = $region45
  $region44: #{nnue_forward.1} parent=0 // pred_region
    _
  $region45: #{nnue_forward.1} parent=0 // pred_fallthru
    _

</llo_original>
